<compile_context>
chip_gen: v7x
topology: tpu7x:2x2x1
jax: 0.10.0
libtpu: 0.0.40
codegen_flags: <defaults>
</compile_context>

<pallas_src>
import functools

import jax
import jax.numpy as jnp
from jax.experimental import pallas as pl
from jax.experimental.pallas import tpu as pltpu

DIMS = [3, 256, 256, 256, 1]


def _round_up(x, m):
    return (x + m - 1) // m * m


def _softplus(x, inv_beta, beta, threshold=20.0):
    # torch.nn.Softplus(beta): (1/beta)*log(1+exp(beta*x)), identity when
    # beta*x > threshold (default 20).  beta*x computed once, multiply by
    # 1/beta instead of dividing.
    bx = beta * x
    safe = jnp.log1p(jnp.exp(jnp.minimum(bx, threshold))) * inv_beta
    return jnp.where(bx > threshold, x, safe)


def mlp_kernel(x_ref, w1_ref, b1_ref, w2_ref, b2_ref, w3_ref, b3_ref,
               w4_ref, b4_ref, o_ref, *, beta):
    inv_beta = 1.0 / beta
    x = x_ref[...]                                   # (T, 3) f32

    # Layer 1 (K=3): degenerate for the MXU -> three VPU broadcast FMAs.
    h = (x[:, 0:1] * w1_ref[0:1, :]
         + x[:, 1:2] * w1_ref[1:2, :]
         + x[:, 2:3] * w1_ref[2:3, :]
         + b1_ref[...])
    h = _softplus(h, inv_beta, beta)

    # Layers 2-3: 256x256 MXU matmuls, bf16 inputs, f32 accumulation.
    h = jnp.dot(h.astype(w2_ref.dtype), w2_ref[...],
                preferred_element_type=jnp.float32) + b2_ref[...]
    h = _softplus(h, inv_beta, beta)
    h = jnp.dot(h.astype(w3_ref.dtype), w3_ref[...],
                preferred_element_type=jnp.float32) + b3_ref[...]
    h = _softplus(h, inv_beta, beta)

    # Layer 4 (output width 1): lane reduction instead of a 1-column matmul.
    o_ref[...] = (jnp.sum(h * w4_ref[...], axis=-1, keepdims=True)
                  + b4_ref[...])


def simple_mlp_forward(x, params, beta, *, tile_n=1024,
                       matmul_dtype=jnp.bfloat16):
    """x: (N, 3) float32. params: list of (W (in,out), b (1,out)). Returns (N, 1)."""
    n = x.shape[0]
    (w1, b1), (w2, b2), (w3, b3), (w4, b4) = params

    # Big 256x256 weights in bf16 for MXU throughput; everything else f32.
    w2 = w2.astype(matmul_dtype)
    w3 = w3.astype(matmul_dtype)
    w4 = w4.reshape(1, DIMS[-2])          # (1, 256) row for the lane reduction
    b4 = b4.reshape(1, 1)

    # Pad the batch so it tiles cleanly (tile rows must be a multiple of 8).
    tile_n = min(tile_n, _round_up(n, 8))
    n_pad = _round_up(n, tile_n)
    if n_pad != n:
        x = jnp.pad(x, ((0, n_pad - n), (0, 0)))
    grid = (n_pad // tile_n,)

    const = lambda i: (0, 0)
    flops = 2 * n_pad * (3 * 256 + 256 * 256 + 256 * 256 + 256)
    transcendentals = 6 * n_pad * 256
    weight_bytes = sum(int(a.size) * a.dtype.itemsize
                       for a in (w1, b1, w2, b2, w3, b3, w4, b4))
    cost = pl.CostEstimate(flops=flops, transcendentals=transcendentals,
                           bytes_accessed=16 * n_pad + weight_bytes)

    out = pl.pallas_call(
        functools.partial(mlp_kernel, beta=beta),
        out_shape=jax.ShapeDtypeStruct((n_pad, 1), jnp.float32),
        grid=grid,
        in_specs=[
            pl.BlockSpec((tile_n, 3), lambda i: (i, 0)),   # x tile
            pl.BlockSpec((3, 256), const),                 # w1 (resident)
            pl.BlockSpec((1, 256), const),                 # b1
            pl.BlockSpec((256, 256), const),               # w2 (bf16, resident)
            pl.BlockSpec((1, 256), const),                 # b2
            pl.BlockSpec((256, 256), const),               # w3 (bf16, resident)
            pl.BlockSpec((1, 256), const),                 # b3
            pl.BlockSpec((1, 256), const),                 # w4 row
            pl.BlockSpec((1, 1), const),                   # b4
        ],
        out_specs=pl.BlockSpec((tile_n, 1), lambda i: (i, 0)),
        compiler_params=pltpu.CompilerParams(
            dimension_semantics=("parallel",)),
        cost_estimate=cost,
    )(x, w1, b1, w2, b2, w3, b3, w4, b4)
    return out[:n]


def init_params(key):
    """Deterministic init mimicking PyTorch Linear default: U(-1/sqrt(in), 1/sqrt(in))."""
    params = []
    for i in range(len(DIMS) - 1):
        fan_in, fan_out = DIMS[i], DIMS[i + 1]
        key, kw, kb = jax.random.split(key, 3)
        bound = 1.0 / jnp.sqrt(fan_in)
        # stored as (in, out) so the kernel computes x @ W
        w = jax.random.uniform(kw, (fan_in, fan_out), jnp.float32, -bound, bound)
        b = jax.random.uniform(kb, (1, fan_out), jnp.float32, -bound, bound)
        params.append((w, b))
    return params


def reference_forward(x, params, beta, matmul_dtype=jnp.bfloat16):
    """Pure-jnp reference with the same bf16-weight / f32-accumulate precision."""
    inv_beta = 1.0 / beta
    (w1, b1), (w2, b2), (w3, b3), (w4, b4) = params
    h = x @ w1 + b1
    h = _softplus(h, inv_beta, beta)
    h = jnp.dot(h.astype(matmul_dtype), w2.astype(matmul_dtype),
                preferred_element_type=jnp.float32) + b2
    h = _softplus(h, inv_beta, beta)
    h = jnp.dot(h.astype(matmul_dtype), w3.astype(matmul_dtype),
                preferred_element_type=jnp.float32) + b3
    h = _softplus(h, inv_beta, beta)
    return h @ w4 + b4


if __name__ == "__main__":
    key = jax.random.PRNGKey(0)
    key, kx = jax.random.split(key)
    beta = 100.0  # Softplus beta (the only configurable parameter of the module)
    params = init_params(key)

    # Small single-tile check (batch=8 -> grid=(1,)).
    x = jax.random.normal(kx, (8, 3), jnp.float32)
    out = jax.block_until_ready(simple_mlp_forward(x, params, beta))
    ref = reference_forward(x, params, beta)
    assert out.shape == (8, 1)
    assert jnp.allclose(out, ref, atol=1e-3, rtol=1e-3)

    # Multi-tile + padding check (batch=20, tile=8 -> grid=(3,), pad to 24).
    key, kx2 = jax.random.split(key)
    x2 = jax.random.normal(kx2, (20, 3), jnp.float32)
    out2 = jax.block_until_ready(simple_mlp_forward(x2, params, beta, tile_n=8))
    ref2 = reference_forward(x2, params, beta)
    assert out2.shape == (20, 1)
    assert jnp.allclose(out2, ref2, atol=1e-3, rtol=1e-3)

    print("KERNEL_OK")
</pallas_src>

<mosaic_0001>
module attributes {stable_mosaic.version = 11 : i64} {
  func.func @mlp_kernel(%arg0: i32, %arg1: memref<8x3xf32, #tpu.memory_space<vmem>>, %arg2: memref<3x256xf32, #tpu.memory_space<vmem>>, %arg3: memref<1x256xf32, #tpu.memory_space<vmem>>, %arg4: memref<256x256xbf16, #tpu.memory_space<vmem>>, %arg5: memref<1x256xf32, #tpu.memory_space<vmem>>, %arg6: memref<256x256xbf16, #tpu.memory_space<vmem>>, %arg7: memref<1x256xf32, #tpu.memory_space<vmem>>, %arg8: memref<1x256xf32, #tpu.memory_space<vmem>>, %arg9: memref<1x1xf32, #tpu.memory_space<vmem>>, %arg10: memref<8x1xf32, #tpu.memory_space<vmem>>) attributes {dimension_semantics = [#tpu.dimension_semantics<parallel>], iteration_bounds = array<i64: 1>, scalar_prefetch = 0 : i64, scratch_operands = 0 : i64, tpu.core_type = #tpu.core_type<tc>, window_params = [{transform_indices = @transform_0, window_bounds = array<i64: 8, 3>}, {pipeline_mode = #tpu.pipeline_mode<synchronous>, transform_indices = @transform_1, window_bounds = array<i64: 3, 256>}, {pipeline_mode = #tpu.pipeline_mode<synchronous>, transform_indices = @transform_2, window_bounds = array<i64: 1, 256>}, {pipeline_mode = #tpu.pipeline_mode<synchronous>, transform_indices = @transform_3, window_bounds = array<i64: 256, 256>}, {pipeline_mode = #tpu.pipeline_mode<synchronous>, transform_indices = @transform_4, window_bounds = array<i64: 1, 256>}, {pipeline_mode = #tpu.pipeline_mode<synchronous>, transform_indices = @transform_5, window_bounds = array<i64: 256, 256>}, {pipeline_mode = #tpu.pipeline_mode<synchronous>, transform_indices = @transform_6, window_bounds = array<i64: 1, 256>}, {pipeline_mode = #tpu.pipeline_mode<synchronous>, transform_indices = @transform_7, window_bounds = array<i64: 1, 256>}, {pipeline_mode = #tpu.pipeline_mode<synchronous>, transform_indices = @transform_8, window_bounds = array<i64: 1, 1>}, {transform_indices = @transform_9, window_bounds = array<i64: 8, 1>}]} {
    %c0 = arith.constant 0 : index
    %c0_0 = arith.constant 0 : index
    %0 = vector.load %arg1[%c0, %c0_0] : memref<8x3xf32, #tpu.memory_space<vmem>>, vector<8x3xf32>
    %1 = vector.extract_strided_slice %0 {offsets = [0, 0], sizes = [8, 1], strides = [1, 1]} : vector<8x3xf32> to vector<8x1xf32>
    %c0_1 = arith.constant 0 : index
    %c0_2 = arith.constant 0 : index
    %2 = vector.load %arg2[%c0_1, %c0_2] : memref<3x256xf32, #tpu.memory_space<vmem>>, vector<1x256xf32>
    %3 = vector.broadcast %1 : vector<8x1xf32> to vector<8x256xf32>
    %4 = vector.broadcast %2 : vector<1x256xf32> to vector<8x256xf32>
    %5 = arith.mulf %3, %4 : vector<8x256xf32>
    %6 = vector.extract_strided_slice %0 {offsets = [0, 1], sizes = [8, 1], strides = [1, 1]} : vector<8x3xf32> to vector<8x1xf32>
    %c1 = arith.constant 1 : index
    %c0_3 = arith.constant 0 : index
    %7 = vector.load %arg2[%c1, %c0_3] : memref<3x256xf32, #tpu.memory_space<vmem>>, vector<1x256xf32>
    %8 = vector.broadcast %6 : vector<8x1xf32> to vector<8x256xf32>
    %9 = vector.broadcast %7 : vector<1x256xf32> to vector<8x256xf32>
    %10 = arith.mulf %8, %9 : vector<8x256xf32>
    %11 = arith.addf %5, %10 : vector<8x256xf32>
    %12 = vector.extract_strided_slice %0 {offsets = [0, 2], sizes = [8, 1], strides = [1, 1]} : vector<8x3xf32> to vector<8x1xf32>
    %c2 = arith.constant 2 : index
    %c0_4 = arith.constant 0 : index
    %13 = vector.load %arg2[%c2, %c0_4] : memref<3x256xf32, #tpu.memory_space<vmem>>, vector<1x256xf32>
    %14 = vector.broadcast %12 : vector<8x1xf32> to vector<8x256xf32>
    %15 = vector.broadcast %13 : vector<1x256xf32> to vector<8x256xf32>
    %16 = arith.mulf %14, %15 : vector<8x256xf32>
    %17 = arith.addf %11, %16 : vector<8x256xf32>
    %c0_5 = arith.constant 0 : index
    %c0_6 = arith.constant 0 : index
    %18 = vector.load %arg3[%c0_5, %c0_6] : memref<1x256xf32, #tpu.memory_space<vmem>>, vector<1x256xf32>
    %19 = vector.broadcast %18 : vector<1x256xf32> to vector<8x256xf32>
    %20 = arith.addf %17, %19 : vector<8x256xf32>
    %cst = arith.constant 1.000000e+02 : f32
    %21 = vector.broadcast %cst : f32 to vector<8x256xf32>
    %22 = arith.mulf %21, %20 : vector<8x256xf32>
    %cst_7 = arith.constant 2.000000e+01 : f32
    %23 = vector.broadcast %cst_7 : f32 to vector<8x256xf32>
    %24 = arith.minimumf %22, %23 : vector<8x256xf32>
    %25 = math.exp %24 : vector<8x256xf32>
    %26 = math.log1p %25 : vector<8x256xf32>
    %cst_8 = arith.constant 0.00999999977 : f32
    %27 = vector.broadcast %cst_8 : f32 to vector<8x256xf32>
    %28 = arith.mulf %26, %27 : vector<8x256xf32>
    %cst_9 = arith.constant 2.000000e+01 : f32
    %29 = vector.broadcast %cst_9 : f32 to vector<8x256xf32>
    %30 = arith.cmpf ogt, %22, %29 : vector<8x256xf32>
    %31 = arith.select %30, %20, %28 : vector<8x256xi1>, vector<8x256xf32>
    %32 = arith.truncf %31 : vector<8x256xf32> to vector<8x256xbf16>
    %c0_10 = arith.constant 0 : index
    %c0_11 = arith.constant 0 : index
    %33 = vector.load %arg4[%c0_10, %c0_11] : memref<256x256xbf16, #tpu.memory_space<vmem>>, vector<256x256xbf16>
    %cst_12 = arith.constant dense<0.000000e+00> : vector<8x256xf32>
    %34 = tpu.matmul %32, %33, %cst_12 {dimension_numbers = #tpu.dot_dimension_numbers<[1], [0], [0], [1], [0, 0, 1, 1], [], []>} : vector<8x256xbf16>, vector<256x256xbf16>, vector<8x256xf32> -> vector<8x256xf32>
    %c0_13 = arith.constant 0 : index
    %c0_14 = arith.constant 0 : index
    %35 = vector.load %arg5[%c0_13, %c0_14] : memref<1x256xf32, #tpu.memory_space<vmem>>, vector<1x256xf32>
    %36 = vector.broadcast %35 : vector<1x256xf32> to vector<8x256xf32>
    %37 = arith.addf %34, %36 : vector<8x256xf32>
    %cst_15 = arith.constant 1.000000e+02 : f32
    %38 = vector.broadcast %cst_15 : f32 to vector<8x256xf32>
    %39 = arith.mulf %38, %37 : vector<8x256xf32>
    %cst_16 = arith.constant 2.000000e+01 : f32
    %40 = vector.broadcast %cst_16 : f32 to vector<8x256xf32>
    %41 = arith.minimumf %39, %40 : vector<8x256xf32>
    %42 = math.exp %41 : vector<8x256xf32>
    %43 = math.log1p %42 : vector<8x256xf32>
    %cst_17 = arith.constant 0.00999999977 : f32
    %44 = vector.broadcast %cst_17 : f32 to vector<8x256xf32>
    %45 = arith.mulf %43, %44 : vector<8x256xf32>
    %cst_18 = arith.constant 2.000000e+01 : f32
    %46 = vector.broadcast %cst_18 : f32 to vector<8x256xf32>
    %47 = arith.cmpf ogt, %39, %46 : vector<8x256xf32>
    %48 = arith.select %47, %37, %45 : vector<8x256xi1>, vector<8x256xf32>
    %49 = arith.truncf %48 : vector<8x256xf32> to vector<8x256xbf16>
    %c0_19 = arith.constant 0 : index
    %c0_20 = arith.constant 0 : index
    %50 = vector.load %arg6[%c0_19, %c0_20] : memref<256x256xbf16, #tpu.memory_space<vmem>>, vector<256x256xbf16>
    %cst_21 = arith.constant dense<0.000000e+00> : vector<8x256xf32>
    %51 = tpu.matmul %49, %50, %cst_21 {dimension_numbers = #tpu.dot_dimension_numbers<[1], [0], [0], [1], [0, 0, 1, 1], [], []>} : vector<8x256xbf16>, vector<256x256xbf16>, vector<8x256xf32> -> vector<8x256xf32>
    %c0_22 = arith.constant 0 : index
    %c0_23 = arith.constant 0 : index
    %52 = vector.load %arg7[%c0_22, %c0_23] : memref<1x256xf32, #tpu.memory_space<vmem>>, vector<1x256xf32>
    %53 = vector.broadcast %52 : vector<1x256xf32> to vector<8x256xf32>
    %54 = arith.addf %51, %53 : vector<8x256xf32>
    %cst_24 = arith.constant 1.000000e+02 : f32
    %55 = vector.broadcast %cst_24 : f32 to vector<8x256xf32>
    %56 = arith.mulf %55, %54 : vector<8x256xf32>
    %cst_25 = arith.constant 2.000000e+01 : f32
    %57 = vector.broadcast %cst_25 : f32 to vector<8x256xf32>
    %58 = arith.minimumf %56, %57 : vector<8x256xf32>
    %59 = math.exp %58 : vector<8x256xf32>
    %60 = math.log1p %59 : vector<8x256xf32>
    %cst_26 = arith.constant 0.00999999977 : f32
    %61 = vector.broadcast %cst_26 : f32 to vector<8x256xf32>
    %62 = arith.mulf %60, %61 : vector<8x256xf32>
    %cst_27 = arith.constant 2.000000e+01 : f32
    %63 = vector.broadcast %cst_27 : f32 to vector<8x256xf32>
    %64 = arith.cmpf ogt, %56, %63 : vector<8x256xf32>
    %65 = arith.select %64, %54, %62 : vector<8x256xi1>, vector<8x256xf32>
    %c0_28 = arith.constant 0 : index
    %c0_29 = arith.constant 0 : index
    %66 = vector.load %arg8[%c0_28, %c0_29] : memref<1x256xf32, #tpu.memory_space<vmem>>, vector<1x256xf32>
    %67 = vector.broadcast %66 : vector<1x256xf32> to vector<8x256xf32>
    %68 = arith.mulf %65, %67 : vector<8x256xf32>
    %cst_30 = arith.constant dense<0.000000e+00> : vector<8xf32>
    %69 = vector.multi_reduction <add>, %68, %cst_30 [1] : vector<8x256xf32> to vector<8xf32>
    %70 = vector.shape_cast %69 : vector<8xf32> to vector<8x1xf32>
    %c0_31 = arith.constant 0 : index
    %c0_32 = arith.constant 0 : index
    %71 = vector.load %arg9[%c0_31, %c0_32] : memref<1x1xf32, #tpu.memory_space<vmem>>, vector<1x1xf32>
    %72 = vector.broadcast %71 : vector<1x1xf32> to vector<8x1xf32>
    %73 = arith.addf %70, %72 : vector<8x1xf32>
    %c0_33 = arith.constant 0 : index
    %c0_34 = arith.constant 0 : index
    %74 = vector.load %arg10[%c0_33, %c0_34] : memref<8x1xf32, #tpu.memory_space<vmem>>, vector<8x1xf32>
    tpu.vector_store %arg10[%c0_33, %c0_34], %73 {strides = array<i32>} : memref<8x1xf32, #tpu.memory_space<vmem>>, vector<8x1xf32>,
    return
  }
  func.func @transform_0(%arg0: i32) -> (i32, i32) {
    %c0_i32 = arith.constant 0 : i32
    %c0_i32_0 = arith.constant 0 : i32
    return %arg0, %c0_i32 : i32, i32
  }
  func.func @transform_1(%arg0: i32) -> (i32, i32) {
    %c0_i32 = arith.constant 0 : i32
    %c0_i32_0 = arith.constant 0 : i32
    %c0_i32_1 = arith.constant 0 : i32
    return %c0_i32, %c0_i32_0 : i32, i32
  }
  func.func @transform_2(%arg0: i32) -> (i32, i32) {
    %c0_i32 = arith.constant 0 : i32
    %c0_i32_0 = arith.constant 0 : i32
    %c0_i32_1 = arith.constant 0 : i32
    return %c0_i32, %c0_i32_0 : i32, i32
  }
  func.func @transform_3(%arg0: i32) -> (i32, i32) {
    %c0_i32 = arith.constant 0 : i32
    %c0_i32_0 = arith.constant 0 : i32
    %c0_i32_1 = arith.constant 0 : i32
    return %c0_i32, %c0_i32_0 : i32, i32
  }
  func.func @transform_4(%arg0: i32) -> (i32, i32) {
    %c0_i32 = arith.constant 0 : i32
    %c0_i32_0 = arith.constant 0 : i32
    %c0_i32_1 = arith.constant 0 : i32
    return %c0_i32, %c0_i32_0 : i32, i32
  }
  func.func @transform_5(%arg0: i32) -> (i32, i32) {
    %c0_i32 = arith.constant 0 : i32
    %c0_i32_0 = arith.constant 0 : i32
    %c0_i32_1 = arith.constant 0 : i32
    return %c0_i32, %c0_i32_0 : i32, i32
  }
  func.func @transform_6(%arg0: i32) -> (i32, i32) {
    %c0_i32 = arith.constant 0 : i32
    %c0_i32_0 = arith.constant 0 : i32
    %c0_i32_1 = arith.constant 0 : i32
    return %c0_i32, %c0_i32_0 : i32, i32
  }
  func.func @transform_7(%arg0: i32) -> (i32, i32) {
    %c0_i32 = arith.constant 0 : i32
    %c0_i32_0 = arith.constant 0 : i32
    %c0_i32_1 = arith.constant 0 : i32
    return %c0_i32, %c0_i32_0 : i32, i32
  }
  func.func @transform_8(%arg0: i32) -> (i32, i32) {
    %c0_i32 = arith.constant 0 : i32
    %c0_i32_0 = arith.constant 0 : i32
    %c0_i32_1 = arith.constant 0 : i32
    return %c0_i32, %c0_i32_0 : i32, i32
  }
  func.func @transform_9(%arg0: i32) -> (i32, i32) {
    %c0_i32 = arith.constant 0 : i32
    %c0_i32_0 = arith.constant 0 : i32
    return %arg0, %c0_i32 : i32, i32
  }
}

</mosaic_0001>

<llo_original>
// kernel: tpu_custom_call.1
$region0: #{tpu_custom_call.1}
  #allocation0 [shape = 'u32[]', space=smem, size = 0x4, offset = 0x4, fixed_abs, tag = 'smem constant byte address 0x4 - core index']
  #allocation1 [shape = 'u32[144,128]{1,0:T(1,128)}', space=vmem, size = 0x12000, scoped, tag = 'internal scratch']
  #allocation2 [shape = 'f32[1,1]{1,0:T(1,128)S(1)}', space=vmem, size = 0x200, scoped, tag = 'scoped memory for tpu_custom_call.1']
  %s0 = inlined_call_operand.vmem [shape: f32[8,3], index: 0, kind: input, shape index: {}]
  %s1 = inlined_call_operand.vmem [shape: f32[3,256], index: 1, kind: input, shape index: {}]
  %s2 = inlined_call_operand.vmem [shape: f32[1,256], index: 2, kind: input, shape index: {}]
  %s3 = inlined_call_operand.hbm [shape: bf16[256,256], index: 3, kind: input, shape index: {}]
  %s4 = inlined_call_operand.vmem [shape: f32[1,256], index: 4, kind: input, shape index: {}]
  %s5 = inlined_call_operand.hbm [shape: bf16[256,256], index: 5, kind: input, shape index: {}]
  %s6 = inlined_call_operand.vmem [shape: f32[1,256], index: 6, kind: input, shape index: {}]
  %s7 = inlined_call_operand.vmem [shape: f32[1,256], index: 7, kind: input, shape index: {}]
  %s8 = inlined_call_operand.<no memory space> [shape: f32[1,1], index: 8, kind: input, shape index: {}]
  %s9 = inlined_call_operand.vmem [shape: f32[8,1], index: 9, kind: output, shape index: {}]
  %s10 = sld [smem:[#allocation0]]
  $region54: #{tpu_custom_call.1} parent=0
    _
  %s12 = ssub.s32 1, %s10
  %s13 = scalar_select 0, %s12, %s10
  %v14 = vstv %s8
  %15 = vst [vmem:[#allocation2] sm:$0x1] %v14
  $region1: #{tpu_custom_call.1} parent=0
    #allocation3 [shape = 'u8[131072]{0}', space=vmem, size = 0x20000, scoped, tag = 'input window, operand 3, single buffered']
    #allocation4 [shape = 's32[1]{0}', space=sflag, size = 0x4, scoped, tag = 'scoped memory for tpu_custom_call.1']
    #allocation5 [shape = 'u8[131072]{0}', space=vmem, size = 0x20000, scoped, tag = 'input window, operand 5, single buffered']
    #allocation6 [shape = 's32[1]{0}', space=sflag, size = 0x4, scoped, tag = 'scoped memory for tpu_custom_call.1']
    %16 = vsyncpa [#allocation4], 0
    %17 = vsyncpa [#allocation6], 0
    // Predicated region
    $region2: #{tpu_custom_call.1} parent=1 // pred_check
      _
    $region3: #{tpu_custom_call.1} parent=1 // pred_check_branch
      %19 = sbr.rel (0) target = $region5
    $region4: #{tpu_custom_call.1} parent=1 // pred_region
      _
    $region5: #{tpu_custom_call.1} parent=1 // pred_fallthru
      _
    // Predicated region
    $region6: #{tpu_custom_call.1} parent=1 // pred_check
      _
    $region7: #{tpu_custom_call.1} parent=1 // pred_check_branch
      %21 = sbr.rel (0) target = $region9
    $region8: #{tpu_custom_call.1} parent=1 // pred_region
      _
    $region9: #{tpu_custom_call.1} parent=1 // pred_fallthru
      _
    // Predicated region
    $region10: #{tpu_custom_call.1} parent=1 // pred_check
      _
    $region11: #{tpu_custom_call.1} parent=1 // pred_check_branch
      %23 = sbr.rel (0) target = $region13
    $region12: #{tpu_custom_call.1} parent=1 // pred_region
      _
    $region13: #{tpu_custom_call.1} parent=1 // pred_fallthru
      _
    // Predicated region
    $region14: #{tpu_custom_call.1} parent=1 // pred_check
      _
    $region15: #{tpu_custom_call.1} parent=1 // pred_check_branch
      %25 = sbr.rel (0) target = $region17
    $region16: #{tpu_custom_call.1} parent=1 // pred_region
      %s27 = ssub.s32 4096, 4096
      %28 = vsyncadd [#allocation4], %s27
      %s29 = sshll.u32 [#allocation3], 4
      %s30 = int_to_ptr.vmem [resolvable:$true] %s29
      %35 = dma.hbm_to_vmem [thread:$0]  %s3, 4096, %s30, [#allocation4], 128, 128, 8
    $region17: #{tpu_custom_call.1} parent=1 // pred_fallthru
      _
    // Predicated region
    $region18: #{tpu_custom_call.1} parent=1 // pred_check
      _
    $region19: #{tpu_custom_call.1} parent=1 // pred_check_branch
      %37 = sbr.rel (0) target = $region21
    $region20: #{tpu_custom_call.1} parent=1 // pred_region
      _
    $region21: #{tpu_custom_call.1} parent=1 // pred_fallthru
      _
    // Predicated region
    $region22: #{tpu_custom_call.1} parent=1 // pred_check
      _
    $region23: #{tpu_custom_call.1} parent=1 // pred_check_branch
      %39 = sbr.rel (0) target = $region25
    $region24: #{tpu_custom_call.1} parent=1 // pred_region
      %s41 = ssub.s32 4096, 4096
      %42 = vsyncadd [#allocation6], %s41
      %s43 = sshll.u32 [#allocation5], 4
      %s44 = int_to_ptr.vmem [resolvable:$true] %s43
      %49 = dma.hbm_to_vmem [thread:$0]  %s5, 4096, %s44, [#allocation6], 128, 128, 8
    $region25: #{tpu_custom_call.1} parent=1 // pred_fallthru
      _
    // Predicated region
    $region26: #{tpu_custom_call.1} parent=1 // pred_check
      _
    $region27: #{tpu_custom_call.1} parent=1 // pred_check_branch
      %51 = sbr.rel (0) target = $region29
    $region28: #{tpu_custom_call.1} parent=1 // pred_region
      _
    $region29: #{tpu_custom_call.1} parent=1 // pred_fallthru
      _
    // Predicated region
    $region30: #{tpu_custom_call.1} parent=1 // pred_check
      _
    $region31: #{tpu_custom_call.1} parent=1 // pred_check_branch
      %53 = sbr.rel (0) target = $region33
    $region32: #{tpu_custom_call.1} parent=1 // pred_region
      _
    $region33: #{tpu_custom_call.1} parent=1 // pred_fallthru
      _
    // Predicated region
    $region34: #{tpu_custom_call.1} parent=1 // pred_check
      _
    $region35: #{tpu_custom_call.1} parent=1 // pred_check_branch
      %55 = sbr.rel (0) target = $region37
    $region36: #{tpu_custom_call.1} parent=1 // pred_region
      _
    $region37: #{tpu_custom_call.1} parent=1 // pred_fallthru
      _
    // Predicated region
    $region38: #{tpu_custom_call.1} parent=1 // pred_check
      _
    $region39: #{tpu_custom_call.1} parent=1 // pred_check_branch
      %57 = sbr.rel (0) target = $region41
    $region40: #{tpu_custom_call.1} parent=1 // pred_region
      %58 = dma.done [#allocation4], 4096
    $region41: #{tpu_custom_call.1} parent=1 // pred_fallthru
      _
    // Predicated region
    $region42: #{tpu_custom_call.1} parent=1 // pred_check
      _
    $region43: #{tpu_custom_call.1} parent=1 // pred_check_branch
      %60 = sbr.rel (0) target = $region45
    $region44: #{tpu_custom_call.1} parent=1 // pred_region
      %61 = dma.done [#allocation6], 4096
    $region45: #{tpu_custom_call.1} parent=1 // pred_fallthru
      _
    %v62 = vld [vmem:[%s0] sm:$0xff]
    %v63 = vld [vmem:[%s1] ss:$4 sm:$0x3]
    %65 = vset.pattern.permute.xlu0 0
    %66 = vperm.xlu0 %65, %v62
    %v67 = vpop.permute.xlu0 %66
    %v70 = vlaneseq
    %v71 = vshrl.u32 %v70, 7
    %v72 = vsub.s32 0, %v71
    %v73 = vrot.slane %v63, %v72
    %v74 = vlaneseq
    %v75 = vshrl.u32 %v74, 7
    %v76 = vsub.s32 1, %v75
    %v77 = vrot.slane %v63, %v76
    %v80 = vmul.f32 %v67, %v73
    %v81 = vmul.f32 %v67, %v77
    %s82 = scalar_lea.vmem %s1, 1
    %v83 = vld [vmem:[%s82] ss:$4 sm:$0x3]
    %84 = vset.pattern.permute.xlu0 1
    %85 = vperm.xlu0 %84, %v62
    %v86 = vpop.permute.xlu0 %85
    %v89 = vlaneseq
    %v90 = vshrl.u32 %v89, 7
    %v91 = vsub.s32 0, %v90
    %v92 = vrot.slane %v83, %v91
    %v93 = vlaneseq
    %v94 = vshrl.u32 %v93, 7
    %v95 = vsub.s32 1, %v94
    %v96 = vrot.slane %v83, %v95
    %v99 = vmul.f32 %v86, %v92
    %v100 = vmul.f32 %v86, %v96
    %v101 = vadd.f32 %v80, %v99
    %v102 = vadd.f32 %v81, %v100
    %s103 = scalar_lea.vmem %s1, 2
    %v104 = vld [vmem:[%s103] ss:$4 sm:$0x3]
    %105 = vset.pattern.permute.xlu0 2
    %106 = vperm.xlu0 %105, %v62
    %v107 = vpop.permute.xlu0 %106
    %v110 = vlaneseq
    %v111 = vshrl.u32 %v110, 7
    %v112 = vsub.s32 0, %v111
    %v113 = vrot.slane %v104, %v112
    %v114 = vlaneseq
    %v115 = vshrl.u32 %v114, 7
    %v116 = vsub.s32 1, %v115
    %v117 = vrot.slane %v104, %v116
    %v120 = vmul.f32 %v107, %v113
    %v121 = vmul.f32 %v107, %v117
    %v122 = vadd.f32 %v101, %v120
    %v123 = vadd.f32 %v102, %v121
    %v124 = vld [vmem:[%s2] sm:$0x3]
    %v126 = vlaneseq
    %v127 = vshrl.u32 %v126, 7
    %v128 = vsub.s32 0, %v127
    %v129 = vrot.slane %v124, %v128
    %v130 = vlaneseq
    %v131 = vshrl.u32 %v130, 7
    %v132 = vsub.s32 1, %v131
    %v133 = vrot.slane %v124, %v132
    %v136 = vadd.f32 %v122, %v129
    %v137 = vadd.f32 %v123, %v133
    %v138 = vmul.f32 %v136, 100.0
    %v139 = vmul.f32 %v137, 100.0
    %v140 = vmin.f32 %v138, 20.0
    %v141 = vmin.f32 %v139, 20.0
    %v142 = vmul.f32 %v140, 1.442695
    %v143 = vpow.pop %v142
    %v144 = vmul.f32 %v141, 1.442695
    %v145 = vpow.pop %v144
    %v146 = vadd.f32 %v143, 1.0
    %v147 = vlog2.pop %v146
    %v148 = vmul.f32 %v147, 0.6931472
    %v149 = vmul.f32 -0.5, %v143
    %v150 = vadd.f32 %v149, 1.0
    %v151 = vmul.f32 %v150, %v143
    %v152 = vand.u32 2147483647, %v143
    %vm153 = vcmp.lt.f32.partialorder %v152, 0.0004427343
    %v154 = vsel %vm153, %v151, %v148
    %v155 = vadd.f32 %v145, 1.0
    %v156 = vlog2.pop %v155
    %v157 = vmul.f32 %v156, 0.6931472
    %v158 = vmul.f32 -0.5, %v145
    %v159 = vadd.f32 %v158, 1.0
    %v160 = vmul.f32 %v159, %v145
    %v161 = vand.u32 2147483647, %v145
    %vm162 = vcmp.lt.f32.partialorder %v161, 0.0004427343
    %v163 = vsel %vm162, %v160, %v157
    %v164 = vmul.f32 %v154, 0.01
    %v165 = vmul.f32 %v163, 0.01
    %vm166 = vcmp.gt.f32.partialorder %v138, 20.0
    %vm167 = vcmp.gt.f32.partialorder %v139, 20.0
    %v168 = vsel %vm166, %v136, %v164
    %v169 = vsel %vm167, %v137, %v165
    %v170 = vpack.c.bf16 %v168, %v168
    %v171 = vpack.c.bf16 %v169, %v169
    %v172 = vld [vmem:[#allocation3] sm:$0xff]
    %v173 = vld [vmem:[#allocation3 + $0x8] sm:$0xff]
    %v174 = vld [vmem:[#allocation3 + $0x10] sm:$0xff]
    %v175 = vld [vmem:[#allocation3 + $0x18] sm:$0xff]
    %v176 = vld [vmem:[#allocation3 + $0x20] sm:$0xff]
    %v177 = vld [vmem:[#allocation3 + $0x28] sm:$0xff]
    %v178 = vld [vmem:[#allocation3 + $0x30] sm:$0xff]
    %v179 = vld [vmem:[#allocation3 + $0x38] sm:$0xff]
    %v180 = vld [vmem:[#allocation3 + $0x40] sm:$0xff]
    %v181 = vld [vmem:[#allocation3 + $0x48] sm:$0xff]
    %v182 = vld [vmem:[#allocation3 + $0x50] sm:$0xff]
    %v183 = vld [vmem:[#allocation3 + $0x58] sm:$0xff]
    %v184 = vld [vmem:[#allocation3 + $0x60] sm:$0xff]
    %v185 = vld [vmem:[#allocation3 + $0x68] sm:$0xff]
    %v186 = vld [vmem:[#allocation3 + $0x70] sm:$0xff]
    %v187 = vld [vmem:[#allocation3 + $0x78] sm:$0xff]
    %v188 = vld [vmem:[#allocation3 + $0x80] sm:$0xff]
    %v189 = vld [vmem:[#allocation3 + $0x88] sm:$0xff]
    %v190 = vld [vmem:[#allocation3 + $0x90] sm:$0xff]
    %v191 = vld [vmem:[#allocation3 + $0x98] sm:$0xff]
    %v192 = vld [vmem:[#allocation3 + $0xa0] sm:$0xff]
    %v193 = vld [vmem:[#allocation3 + $0xa8] sm:$0xff]
    %v194 = vld [vmem:[#allocation3 + $0xb0] sm:$0xff]
    %v195 = vld [vmem:[#allocation3 + $0xb8] sm:$0xff]
    %v196 = vld [vmem:[#allocation3 + $0xc0] sm:$0xff]
    %v197 = vld [vmem:[#allocation3 + $0xc8] sm:$0xff]
    %v198 = vld [vmem:[#allocation3 + $0xd0] sm:$0xff]
    %v199 = vld [vmem:[#allocation3 + $0xd8] sm:$0xff]
    %v200 = vld [vmem:[#allocation3 + $0xe0] sm:$0xff]
    %v201 = vld [vmem:[#allocation3 + $0xe8] sm:$0xff]
    %v202 = vld [vmem:[#allocation3 + $0xf0] sm:$0xff]
    %v203 = vld [vmem:[#allocation3 + $0xf8] sm:$0xff]
    %v204 = vld [vmem:[%s4] sm:$0x3]
    %v206 = vlaneseq
    %v207 = vshrl.u32 %v206, 7
    %v208 = vsub.s32 0, %v207
    %v209 = vrot.slane %v204, %v208
    %v210 = vlaneseq
    %v211 = vshrl.u32 %v210, 7
    %v212 = vsub.s32 1, %v211
    %v213 = vrot.slane %v204, %v212
    %v248 = vunpack.c.l.b16 %v172
    %v249 = vunpack.c.h.b16 %v172
    %v250 = vunpack.c.l.b16 %v173
    %v251 = vunpack.c.h.b16 %v173
    %v252 = vunpack.c.l.b16 %v174
    %v253 = vunpack.c.h.b16 %v174
    %v254 = vunpack.c.l.b16 %v175
    %v255 = vunpack.c.h.b16 %v175
    %v256 = vunpack.c.l.b16 %v176
    %v257 = vunpack.c.h.b16 %v176
    %v258 = vunpack.c.l.b16 %v177
    %v259 = vunpack.c.h.b16 %v177
    %v260 = vunpack.c.l.b16 %v178
    %v261 = vunpack.c.h.b16 %v178
    %v262 = vunpack.c.l.b16 %v179
    %v263 = vunpack.c.h.b16 %v179
    %v264 = vunpack.c.l.b16 %v180
    %v265 = vunpack.c.h.b16 %v180
    %v266 = vunpack.c.l.b16 %v181
    %v267 = vunpack.c.h.b16 %v181
    %v268 = vunpack.c.l.b16 %v182
    %v269 = vunpack.c.h.b16 %v182
    %v270 = vunpack.c.l.b16 %v183
    %v271 = vunpack.c.h.b16 %v183
    %v272 = vunpack.c.l.b16 %v184
    %v273 = vunpack.c.h.b16 %v184
    %v274 = vunpack.c.l.b16 %v185
    %v275 = vunpack.c.h.b16 %v185
    %v276 = vunpack.c.l.b16 %v186
    %v277 = vunpack.c.h.b16 %v186
    %v278 = vunpack.c.l.b16 %v187
    %v279 = vunpack.c.h.b16 %v187
    %v280 = vunpack.c.l.b16 %v188
    %v281 = vunpack.c.h.b16 %v188
    %v282 = vunpack.c.l.b16 %v189
    %v283 = vunpack.c.h.b16 %v189
    %v284 = vunpack.c.l.b16 %v190
    %v285 = vunpack.c.h.b16 %v190
    %v286 = vunpack.c.l.b16 %v191
    %v287 = vunpack.c.h.b16 %v191
    %v288 = vunpack.c.l.b16 %v192
    %v289 = vunpack.c.h.b16 %v192
    %v290 = vunpack.c.l.b16 %v193
    %v291 = vunpack.c.h.b16 %v193
    %v292 = vunpack.c.l.b16 %v194
    %v293 = vunpack.c.h.b16 %v194
    %v294 = vunpack.c.l.b16 %v195
    %v295 = vunpack.c.h.b16 %v195
    %v296 = vunpack.c.l.b16 %v196
    %v297 = vunpack.c.h.b16 %v196
    %v298 = vunpack.c.l.b16 %v197
    %v299 = vunpack.c.h.b16 %v197
    %v300 = vunpack.c.l.b16 %v198
    %v301 = vunpack.c.h.b16 %v198
    %v302 = vunpack.c.l.b16 %v199
    %v303 = vunpack.c.h.b16 %v199
    %v304 = vunpack.c.l.b16 %v200
    %v305 = vunpack.c.h.b16 %v200
    %v306 = vunpack.c.l.b16 %v201
    %v307 = vunpack.c.h.b16 %v201
    %v308 = vunpack.c.l.b16 %v202
    %v309 = vunpack.c.h.b16 %v202
    %v310 = vunpack.c.l.b16 %v203
    %v311 = vunpack.c.h.b16 %v203
    %v312 = vpack.c.b16 %v250, %v248
    %v313 = vpack.c.b16 %v251, %v249
    %v314 = vpack.c.b16 %v254, %v252
    %v315 = vpack.c.b16 %v255, %v253
    %v316 = vpack.c.b16 %v258, %v256
    %v317 = vpack.c.b16 %v259, %v257
    %v318 = vpack.c.b16 %v262, %v260
    %v319 = vpack.c.b16 %v263, %v261
    %v320 = vpack.c.b16 %v266, %v264
    %v321 = vpack.c.b16 %v267, %v265
    %v322 = vpack.c.b16 %v270, %v268
    %v323 = vpack.c.b16 %v271, %v269
    %v324 = vpack.c.b16 %v274, %v272
    %v325 = vpack.c.b16 %v275, %v273
    %v326 = vpack.c.b16 %v278, %v276
    %v327 = vpack.c.b16 %v279, %v277
    %v328 = vpack.c.b16 %v282, %v280
    %v329 = vpack.c.b16 %v283, %v281
    %v330 = vpack.c.b16 %v286, %v284
    %v331 = vpack.c.b16 %v287, %v285
    %v332 = vpack.c.b16 %v290, %v288
    %v333 = vpack.c.b16 %v291, %v289
    %v334 = vpack.c.b16 %v294, %v292
    %v335 = vpack.c.b16 %v295, %v293
    %v336 = vpack.c.b16 %v298, %v296
    %v337 = vpack.c.b16 %v299, %v297
    %v338 = vpack.c.b16 %v302, %v300
    %v339 = vpack.c.b16 %v303, %v301
    %v340 = vpack.c.b16 %v306, %v304
    %v341 = vpack.c.b16 %v307, %v305
    %v342 = vpack.c.b16 %v310, %v308
    %v343 = vpack.c.b16 %v311, %v309
    %376 = vmatprep.subr.bf16.mxu0 %v313
    %377 = vmatpush1.bf16.msra.mxu0 %v312
    %378 = vmatprep.subr.bf16.mxu0 %v315
    %379 = vmatpush1.bf16.msra.mxu0 %v314
    %380 = vmatprep.subr.bf16.mxu0 %v317
    %381 = vmatpush1.bf16.msra.mxu0 %v316
    %382 = vmatprep.subr.bf16.mxu0 %v319
    %383 = vmatpush1.bf16.msra.mxu0 %v318
    %384 = vmatprep.subr.bf16.mxu0 %v321
    %385 = vmatpush1.bf16.msra.mxu0 %v320
    %386 = vmatprep.subr.bf16.mxu0 %v323
    %387 = vmatpush1.bf16.msra.mxu0 %v322
    %388 = vmatprep.subr.bf16.mxu0 %v325
    %389 = vmatpush1.bf16.msra.mxu0 %v324
    %390 = vmatprep.subr.bf16.mxu0 %v327
    %391 = vmatpush1.bf16.msra.mxu0 %v326
    %392 = vmatprep.subr.bf16.mxu0 %v329
    %393 = vmatpush1.bf16.msra.mxu0 %v328
    %394 = vmatprep.subr.bf16.mxu0 %v331
    %395 = vmatpush1.bf16.msra.mxu0 %v330
    %396 = vmatprep.subr.bf16.mxu0 %v333
    %397 = vmatpush1.bf16.msra.mxu0 %v332
    %398 = vmatprep.subr.bf16.mxu0 %v335
    %399 = vmatpush1.bf16.msra.mxu0 %v334
    %400 = vmatprep.subr.bf16.mxu0 %v337
    %401 = vmatpush1.bf16.msra.mxu0 %v336
    %402 = vmatprep.subr.bf16.mxu0 %v339
    %403 = vmatpush1.bf16.msra.mxu0 %v338
    %404 = vmatprep.subr.bf16.mxu0 %v341
    %405 = vmatpush1.bf16.msra.mxu0 %v340
    %406 = vmatprep.subr.bf16.mxu0 %v343
    %407 = vmatpush1.bf16.msra.mxu0 %v342
    %408 = vmatprep.mubr.bf16.mxu0 %v171
    %409 = vmatmul.mubr.bf16.gmra.mrb[0].mxu0 %v170
    %v410 = vpop.f32.mrb[0].mxu0
    %v411 = vadd.f32 %v209, %v410
    %v412 = vpop.f32.mrb[0].mxu0
    %v413 = vadd.f32 %v213, %v412
    %v414 = vpop.f32.mrb[0].mxu0
    %v415 = vpop.f32.mrb[0].mxu0
    %416 = vdwg.mxu0
    %v417 = vmul.f32 %v411, 100.0
    %v418 = vmul.f32 %v413, 100.0
    %v419 = vmin.f32 %v417, 20.0
    %v420 = vmin.f32 %v418, 20.0
    %v421 = vmul.f32 %v419, 1.442695
    %v422 = vpow.pop %v421
    %v423 = vmul.f32 %v420, 1.442695
    %v424 = vpow.pop %v423
    %v425 = vadd.f32 %v422, 1.0
    %v426 = vlog2.pop %v425
    %v427 = vmul.f32 %v426, 0.6931472
    %v428 = vmul.f32 -0.5, %v422
    %v429 = vadd.f32 %v428, 1.0
    %v430 = vmul.f32 %v429, %v422
    %v431 = vand.u32 2147483647, %v422
    %vm432 = vcmp.lt.f32.partialorder %v431, 0.0004427343
    %v433 = vsel %vm432, %v430, %v427
    %v434 = vadd.f32 %v424, 1.0
    %v435 = vlog2.pop %v434
    %v436 = vmul.f32 %v435, 0.6931472
    %v437 = vmul.f32 -0.5, %v424
    %v438 = vadd.f32 %v437, 1.0
    %v439 = vmul.f32 %v438, %v424
    %v440 = vand.u32 2147483647, %v424
    %vm441 = vcmp.lt.f32.partialorder %v440, 0.0004427343
    %v442 = vsel %vm441, %v439, %v436
    %v443 = vmul.f32 %v433, 0.01
    %v444 = vmul.f32 %v442, 0.01
    %vm445 = vcmp.gt.f32.partialorder %v417, 20.0
    %vm446 = vcmp.gt.f32.partialorder %v418, 20.0
    %v447 = vsel %vm445, %v411, %v443
    %v448 = vsel %vm446, %v413, %v444
    %v449 = vpack.c.bf16 %v447, %v447
    %v450 = vpack.c.bf16 %v448, %v448
    %v451 = vld [vmem:[#allocation5] sm:$0xff]
    %v452 = vld [vmem:[#allocation5 + $0x8] sm:$0xff]
    %v453 = vld [vmem:[#allocation5 + $0x10] sm:$0xff]
    %v454 = vld [vmem:[#allocation5 + $0x18] sm:$0xff]
    %v455 = vld [vmem:[#allocation5 + $0x20] sm:$0xff]
    %v456 = vld [vmem:[#allocation5 + $0x28] sm:$0xff]
    %v457 = vld [vmem:[#allocation5 + $0x30] sm:$0xff]
    %v458 = vld [vmem:[#allocation5 + $0x38] sm:$0xff]
    %v459 = vld [vmem:[#allocation5 + $0x40] sm:$0xff]
    %v460 = vld [vmem:[#allocation5 + $0x48] sm:$0xff]
    %v461 = vld [vmem:[#allocation5 + $0x50] sm:$0xff]
    %v462 = vld [vmem:[#allocation5 + $0x58] sm:$0xff]
    %v463 = vld [vmem:[#allocation5 + $0x60] sm:$0xff]
    %v464 = vld [vmem:[#allocation5 + $0x68] sm:$0xff]
    %v465 = vld [vmem:[#allocation5 + $0x70] sm:$0xff]
    %v466 = vld [vmem:[#allocation5 + $0x78] sm:$0xff]
    %v467 = vld [vmem:[#allocation5 + $0x80] sm:$0xff]
    %v468 = vld [vmem:[#allocation5 + $0x88] sm:$0xff]
    %v469 = vld [vmem:[#allocation5 + $0x90] sm:$0xff]
    %v470 = vld [vmem:[#allocation5 + $0x98] sm:$0xff]
    %v471 = vld [vmem:[#allocation5 + $0xa0] sm:$0xff]
    %v472 = vld [vmem:[#allocation5 + $0xa8] sm:$0xff]
    %v473 = vld [vmem:[#allocation5 + $0xb0] sm:$0xff]
    %v474 = vld [vmem:[#allocation5 + $0xb8] sm:$0xff]
    %v475 = vld [vmem:[#allocation5 + $0xc0] sm:$0xff]
    %v476 = vld [vmem:[#allocation5 + $0xc8] sm:$0xff]
    %v477 = vld [vmem:[#allocation5 + $0xd0] sm:$0xff]
    %v478 = vld [vmem:[#allocation5 + $0xd8] sm:$0xff]
    %v479 = vld [vmem:[#allocation5 + $0xe0] sm:$0xff]
    %v480 = vld [vmem:[#allocation5 + $0xe8] sm:$0xff]
    %v481 = vld [vmem:[#allocation5 + $0xf0] sm:$0xff]
    %v482 = vld [vmem:[#allocation5 + $0xf8] sm:$0xff]
    %v483 = vld [vmem:[%s6] sm:$0x3]
    %v485 = vlaneseq
    %v486 = vshrl.u32 %v485, 7
    %v487 = vsub.s32 0, %v486
    %v488 = vrot.slane %v483, %v487
    %v489 = vlaneseq
    %v490 = vshrl.u32 %v489, 7
    %v491 = vsub.s32 1, %v490
    %v492 = vrot.slane %v483, %v491
    %v527 = vunpack.c.l.b16 %v451
    %v528 = vunpack.c.h.b16 %v451
    %v529 = vunpack.c.l.b16 %v452
    %v530 = vunpack.c.h.b16 %v452
    %v531 = vunpack.c.l.b16 %v453
    %v532 = vunpack.c.h.b16 %v453
    %v533 = vunpack.c.l.b16 %v454
    %v534 = vunpack.c.h.b16 %v454
    %v535 = vunpack.c.l.b16 %v455
    %v536 = vunpack.c.h.b16 %v455
    %v537 = vunpack.c.l.b16 %v456
    %v538 = vunpack.c.h.b16 %v456
    %v539 = vunpack.c.l.b16 %v457
    %v540 = vunpack.c.h.b16 %v457
    %v541 = vunpack.c.l.b16 %v458
    %v542 = vunpack.c.h.b16 %v458
    %v543 = vunpack.c.l.b16 %v459
    %v544 = vunpack.c.h.b16 %v459
    %v545 = vunpack.c.l.b16 %v460
    %v546 = vunpack.c.h.b16 %v460
    %v547 = vunpack.c.l.b16 %v461
    %v548 = vunpack.c.h.b16 %v461
    %v549 = vunpack.c.l.b16 %v462
    %v550 = vunpack.c.h.b16 %v462
    %v551 = vunpack.c.l.b16 %v463
    %v552 = vunpack.c.h.b16 %v463
    %v553 = vunpack.c.l.b16 %v464
    %v554 = vunpack.c.h.b16 %v464
    %v555 = vunpack.c.l.b16 %v465
    %v556 = vunpack.c.h.b16 %v465
    %v557 = vunpack.c.l.b16 %v466
    %v558 = vunpack.c.h.b16 %v466
    %v559 = vunpack.c.l.b16 %v467
    %v560 = vunpack.c.h.b16 %v467
    %v561 = vunpack.c.l.b16 %v468
    %v562 = vunpack.c.h.b16 %v468
    %v563 = vunpack.c.l.b16 %v469
    %v564 = vunpack.c.h.b16 %v469
    %v565 = vunpack.c.l.b16 %v470
    %v566 = vunpack.c.h.b16 %v470
    %v567 = vunpack.c.l.b16 %v471
    %v568 = vunpack.c.h.b16 %v471
    %v569 = vunpack.c.l.b16 %v472
    %v570 = vunpack.c.h.b16 %v472
    %v571 = vunpack.c.l.b16 %v473
    %v572 = vunpack.c.h.b16 %v473
    %v573 = vunpack.c.l.b16 %v474
    %v574 = vunpack.c.h.b16 %v474
    %v575 = vunpack.c.l.b16 %v475
    %v576 = vunpack.c.h.b16 %v475
    %v577 = vunpack.c.l.b16 %v476
    %v578 = vunpack.c.h.b16 %v476
    %v579 = vunpack.c.l.b16 %v477
    %v580 = vunpack.c.h.b16 %v477
    %v581 = vunpack.c.l.b16 %v478
    %v582 = vunpack.c.h.b16 %v478
    %v583 = vunpack.c.l.b16 %v479
    %v584 = vunpack.c.h.b16 %v479
    %v585 = vunpack.c.l.b16 %v480
    %v586 = vunpack.c.h.b16 %v480
    %v587 = vunpack.c.l.b16 %v481
    %v588 = vunpack.c.h.b16 %v481
    %v589 = vunpack.c.l.b16 %v482
    %v590 = vunpack.c.h.b16 %v482
    %v591 = vpack.c.b16 %v529, %v527
    %v592 = vpack.c.b16 %v530, %v528
    %v593 = vpack.c.b16 %v533, %v531
    %v594 = vpack.c.b16 %v534, %v532
    %v595 = vpack.c.b16 %v537, %v535
    %v596 = vpack.c.b16 %v538, %v536
    %v597 = vpack.c.b16 %v541, %v539
    %v598 = vpack.c.b16 %v542, %v540
    %v599 = vpack.c.b16 %v545, %v543
    %v600 = vpack.c.b16 %v546, %v544
    %v601 = vpack.c.b16 %v549, %v547
    %v602 = vpack.c.b16 %v550, %v548
    %v603 = vpack.c.b16 %v553, %v551
    %v604 = vpack.c.b16 %v554, %v552
    %v605 = vpack.c.b16 %v557, %v555
    %v606 = vpack.c.b16 %v558, %v556
    %v607 = vpack.c.b16 %v561, %v559
    %v608 = vpack.c.b16 %v562, %v560
    %v609 = vpack.c.b16 %v565, %v563
    %v610 = vpack.c.b16 %v566, %v564
    %v611 = vpack.c.b16 %v569, %v567
    %v612 = vpack.c.b16 %v570, %v568
    %v613 = vpack.c.b16 %v573, %v571
    %v614 = vpack.c.b16 %v574, %v572
    %v615 = vpack.c.b16 %v577, %v575
    %v616 = vpack.c.b16 %v578, %v576
    %v617 = vpack.c.b16 %v581, %v579
    %v618 = vpack.c.b16 %v582, %v580
    %v619 = vpack.c.b16 %v585, %v583
    %v620 = vpack.c.b16 %v586, %v584
    %v621 = vpack.c.b16 %v589, %v587
    %v622 = vpack.c.b16 %v590, %v588
    %655 = vmatprep.subr.bf16.mxu0 %v592
    %656 = vmatpush1.bf16.msra.mxu0 %v591
    %657 = vmatprep.subr.bf16.mxu0 %v594
    %658 = vmatpush1.bf16.msra.mxu0 %v593
    %659 = vmatprep.subr.bf16.mxu0 %v596
    %660 = vmatpush1.bf16.msra.mxu0 %v595
    %661 = vmatprep.subr.bf16.mxu0 %v598
    %662 = vmatpush1.bf16.msra.mxu0 %v597
    %663 = vmatprep.subr.bf16.mxu0 %v600
    %664 = vmatpush1.bf16.msra.mxu0 %v599
    %665 = vmatprep.subr.bf16.mxu0 %v602
    %666 = vmatpush1.bf16.msra.mxu0 %v601
    %667 = vmatprep.subr.bf16.mxu0 %v604
    %668 = vmatpush1.bf16.msra.mxu0 %v603
    %669 = vmatprep.subr.bf16.mxu0 %v606
    %670 = vmatpush1.bf16.msra.mxu0 %v605
    %671 = vmatprep.subr.bf16.mxu0 %v608
    %672 = vmatpush1.bf16.msra.mxu0 %v607
    %673 = vmatprep.subr.bf16.mxu0 %v610
    %674 = vmatpush1.bf16.msra.mxu0 %v609
    %675 = vmatprep.subr.bf16.mxu0 %v612
    %676 = vmatpush1.bf16.msra.mxu0 %v611
    %677 = vmatprep.subr.bf16.mxu0 %v614
    %678 = vmatpush1.bf16.msra.mxu0 %v613
    %679 = vmatprep.subr.bf16.mxu0 %v616
    %680 = vmatpush1.bf16.msra.mxu0 %v615
    %681 = vmatprep.subr.bf16.mxu0 %v618
    %682 = vmatpush1.bf16.msra.mxu0 %v617
    %683 = vmatprep.subr.bf16.mxu0 %v620
    %684 = vmatpush1.bf16.msra.mxu0 %v619
    %685 = vmatprep.subr.bf16.mxu0 %v622
    %686 = vmatpush1.bf16.msra.mxu0 %v621
    %687 = vmatprep.mubr.bf16.mxu0 %v450
    %688 = vmatmul.mubr.bf16.gmra.mrb[0].mxu0 %v449
    %v689 = vpop.f32.mrb[0].mxu0
    %v690 = vadd.f32 %v488, %v689
    %v691 = vpop.f32.mrb[0].mxu0
    %v692 = vadd.f32 %v492, %v691
    %v693 = vpop.f32.mrb[0].mxu0
    %v694 = vpop.f32.mrb[0].mxu0
    %695 = vdwg.mxu0
    %v696 = vmul.f32 %v690, 100.0
    %v697 = vmul.f32 %v692, 100.0
    %v698 = vmin.f32 %v696, 20.0
    %v699 = vmin.f32 %v697, 20.0
    %v700 = vmul.f32 %v698, 1.442695
    %v701 = vpow.pop %v700
    %v702 = vmul.f32 %v699, 1.442695
    %v703 = vpow.pop %v702
    %v704 = vadd.f32 %v701, 1.0
    %v705 = vlog2.pop %v704
    %v706 = vmul.f32 %v705, 0.6931472
    %v707 = vmul.f32 -0.5, %v701
    %v708 = vadd.f32 %v707, 1.0
    %v709 = vmul.f32 %v708, %v701
    %v710 = vand.u32 2147483647, %v701
    %vm711 = vcmp.lt.f32.partialorder %v710, 0.0004427343
    %v712 = vsel %vm711, %v709, %v706
    %v713 = vadd.f32 %v703, 1.0
    %v714 = vlog2.pop %v713
    %v715 = vmul.f32 %v714, 0.6931472
    %v716 = vmul.f32 -0.5, %v703
    %v717 = vadd.f32 %v716, 1.0
    %v718 = vmul.f32 %v717, %v703
    %v719 = vand.u32 2147483647, %v703
    %vm720 = vcmp.lt.f32.partialorder %v719, 0.0004427343
    %v721 = vsel %vm720, %v718, %v715
    %v722 = vmul.f32 %v712, 0.01
    %v723 = vmul.f32 %v721, 0.01
    %vm724 = vcmp.gt.f32.partialorder %v696, 20.0
    %vm725 = vcmp.gt.f32.partialorder %v697, 20.0
    %v726 = vsel %vm724, %v690, %v722
    %v727 = vsel %vm725, %v692, %v723
    %v728 = vld [vmem:[%s7] sm:$0x3]
    %v730 = vlaneseq
    %v731 = vshrl.u32 %v730, 7
    %v732 = vsub.s32 0, %v731
    %v733 = vrot.slane %v728, %v732
    %v734 = vlaneseq
    %v735 = vshrl.u32 %v734, 7
    %v736 = vsub.s32 1, %v735
    %v737 = vrot.slane %v728, %v736
    %v740 = vmul.f32 %v726, %v733
    %v741 = vmul.f32 %v727, %v737
    %v742 = vadd.f32 %v740, %v741
    %743 = vadd.xlane.f32.xlu0 %v742
    %v744 = vpop.xlane.xlu0 %743
    %v745 = vld [vmem:[#allocation2] sm:$0x1]
    %v747 = vlaneseq
    %v748 = vshrl.u32 %v747, 7
    %v749 = vsub.s32 0, %v748
    %v750 = vrot.slane %v745, %v749
    %v752 = vadd.f32 %v744, %v750
    %vm753 = vcmask 7168
    %754 = vst.msk [vmem:[%s9] sm:$0xff] %vm753, %v752
    // Predicated region
    $region46: #{tpu_custom_call.1} parent=1 // pred_check
      _
    $region47: #{tpu_custom_call.1} parent=1 // pred_check_branch
      %756 = sbr.rel (0) target = $region49
    $region48: #{tpu_custom_call.1} parent=1 // pred_region
      _
    $region49: #{tpu_custom_call.1} parent=1 // pred_fallthru
      _
    // Predicated region
    $region50: #{tpu_custom_call.1} parent=1 // pred_check
      _
    $region51: #{tpu_custom_call.1} parent=1 // pred_check_branch
      %758 = sbr.rel (0) target = $region53
    $region52: #{tpu_custom_call.1} parent=1 // pred_region
      _
    $region53: #{tpu_custom_call.1} parent=1 // pred_fallthru
      _
    %759 = vsyncpa [#allocation4], 1
    %760 = vsyncpa [#allocation6], 1

</llo_original>
